<compile_context>
chip_gen: v5e
topology: v5e:2x2
jax: 0.10.0
libtpu: 0.0.40
codegen_flags: <defaults>
</compile_context>

<pallas_src>
import functools

import jax
import jax.numpy as jnp
from jax.experimental import pallas as pl
from jax.experimental.pallas import tpu as pltpu


# --------------------------------------------------------------------------------------------
# Hardware queries (generation-aware VMEM budgeting, v5e bf16 check).
# --------------------------------------------------------------------------------------------
def _physical_vmem_bytes():
    try:
        return int(pltpu.get_tpu_info().vmem_capacity_bytes)
    except Exception:
        return 64 * 1024 * 1024  # conservative fallback = v7x per-TC VMEM


def _is_v5e():
    try:
        kind = jax.devices()[0].device_kind.lower()
    except Exception:
        return False
    return ("v5 lite" in kind) or ("v5e" in kind)


# --------------------------------------------------------------------------------------------
# Kernel body (shared by the no-grid and batch-tiled paths).
# --------------------------------------------------------------------------------------------
def _two_layer_kernel(x_ref, w1_ref, b1_ref, w2_ref, b2_ref, o_ref, *, return_softmax):
    # fc1: x @ W1 + b1 -> ReLU.  MXU dots in the weights' compute dtype (bf16 on v6e/v7x,
    # f32 on v5e), f32 accumulation, f32 elementwise on the VPU.
    x = x_ref[...].astype(w1_ref.dtype)
    h1 = jnp.dot(x, w1_ref[...], preferred_element_type=jnp.float32)
    h1 = jnp.maximum(h1 + b1_ref[...], 0.0)          # b1 is (1, hidden) -> broadcast over batch
    # TODO(synk): nn.Dropout is identity in eval mode; training-mode dropout (pltpu.prng_* mask
    # plus 1/(1-p) scaling) is not implemented here.
    # fc2: h1 @ W2 + b2.
    h2 = jnp.dot(h1.astype(w2_ref.dtype), w2_ref[...], preferred_element_type=jnp.float32)
    h2 = h2 + b2_ref[...]                             # b2 is (1, output) -> broadcast over batch
    if return_softmax:
        m = jnp.max(h2, axis=-1, keepdims=True)
        e = jnp.exp(h2 - m)
        denom = jnp.sum(e, axis=-1, keepdims=True)
        # approx reciprocal rides the EUP slot (~1e-3 rel error on probabilities).
        h2 = e * pl.reciprocal(denom, approx=True)
    o_ref[...] = h2.astype(o_ref.dtype)


# --------------------------------------------------------------------------------------------
# Parameter prep (done once, outside the per-call path — avoids re-casting weights every call).
# --------------------------------------------------------------------------------------------
def prepare_params(w1, b1, w2, b2, compute_dtype=None):
    """w1: (in, hidden); b1: (hidden,); w2: (hidden, out); b2: (out,)."""
    if compute_dtype is None:
        # v5e's VPU has no native bf16 and the K<=32 dots are overhead-bound anyway: stay f32.
        compute_dtype = jnp.float32 if _is_v5e() else jnp.bfloat16
    w1 = w1.astype(compute_dtype)
    w2 = w2.astype(compute_dtype)
    b1 = b1.reshape(1, -1).astype(jnp.float32)
    b2 = b2.reshape(1, -1).astype(jnp.float32)
    return w1, b1, w2, b2


def _no_grid_row_limit(in_dim, hidden, out_dim, vmem_limit_bytes):
    # Per-row VMEM on the no-grid path: x (f32) + out (f32) + f32 intermediates (h1, h2)
    # + half-width compute-dtype copies of x/h1.  Keep total under half the scoped limit.
    per_row = 4 * (in_dim + hidden + out_dim) + 2 * (in_dim + hidden)
    return max(8, (vmem_limit_bytes // 2) // per_row)


# --------------------------------------------------------------------------------------------
# Forward wrapper.
# --------------------------------------------------------------------------------------------
def two_layers_forward(x, params, return_softmax, *, batch_tile=4096, no_grid_rows=None):
    """x: (B, input_dim) f32; params: output of prepare_params. Returns (B, output) float32."""
    w1, b1, w2, b2 = params
    B, in_dim = x.shape
    hidden = w1.shape[1]
    out_dim = w2.shape[1]

    physical_vmem = _physical_vmem_bytes()
    # Explicit scoped-VMEM limit: generous but generation-safe (v7x 64 MiB physical -> 48 MiB;
    # v5e/v6e 128 MiB -> 96 MiB).  Also lifts v5e's 16 MiB scoped default out of the way.
    vmem_limit = min(int(physical_vmem * 3 // 4), 100 * 1024 * 1024)
    if no_grid_rows is None:
        no_grid_rows = _no_grid_row_limit(in_dim, hidden, out_dim, vmem_limit)

    kernel = functools.partial(_two_layer_kernel, return_softmax=return_softmax)
    out_shape = jax.ShapeDtypeStruct((B, out_dim), jnp.float32)

    if B <= no_grid_rows:
        # Single invocation, no grid: everything lands in VMEM once, zero per-step pipeline
        # overhead (~0.35 us/step avoided).  With in/hidden/out = 32/32/16 this covers tens of
        # thousands of rows even on v7x's 64 MiB VMEM.
        return pl.pallas_call(
            kernel,
            out_shape=out_shape,
            in_specs=[pl.BlockSpec(memory_space=pltpu.MemorySpace.VMEM)] * 5,
            out_specs=pl.BlockSpec(memory_space=pltpu.MemorySpace.VMEM),
            compiler_params=pltpu.CompilerParams(vmem_limit_bytes=vmem_limit),
        )(x, w1, b1, w2, b2)

    # Very large batch: tile the batch dimension.  Weights/biases have a constant (0, 0)
    # index_map, so Pallas never re-DMAs them (the idle second buffer is ~8-16 KiB; a
    # pipeline_mode=pl.Buffered(1) single-buffer request was deliberately omitted to keep the
    # compile path maximally robust).  "parallel" lets v7x's two TensorCores split the batch.
    assert batch_tile % 8 == 0, "batch_tile must be a multiple of 8 (sublane constraint)"
    grid = (pl.cdiv(B, batch_tile),)
    return pl.pallas_call(
        kernel,
        out_shape=out_shape,
        grid=grid,
        in_specs=[
            pl.BlockSpec((batch_tile, in_dim), lambda i: (i, 0)),
            pl.BlockSpec((in_dim, hidden), lambda i: (0, 0)),
            pl.BlockSpec((1, hidden), lambda i: (0, 0)),
            pl.BlockSpec((hidden, out_dim), lambda i: (0, 0)),
            pl.BlockSpec((1, out_dim), lambda i: (0, 0)),
        ],
        out_specs=pl.BlockSpec((batch_tile, out_dim), lambda i: (i, 0)),
        compiler_params=pltpu.CompilerParams(
            dimension_semantics=("parallel",),
            vmem_limit_bytes=vmem_limit,
        ),
    )(x, w1, b1, w2, b2)


# --------------------------------------------------------------------------------------------
# Init + pure-JAX reference (same compute-dtype recipe as the kernel).
# --------------------------------------------------------------------------------------------
def init_params(key, input_dim, hidden_dim, output_dim):
    """Deterministic init mimicking nn.Linear's uniform(-1/sqrt(fan_in), 1/sqrt(fan_in))."""
    k1, k2, k3, k4 = jax.random.split(key, 4)
    bound1 = 1.0 / jnp.sqrt(input_dim)
    bound2 = 1.0 / jnp.sqrt(hidden_dim)
    # Stored already transposed: (in_features, out_features).
    w1 = jax.random.uniform(k1, (input_dim, hidden_dim), jnp.float32, -bound1, bound1)
    b1 = jax.random.uniform(k2, (hidden_dim,), jnp.float32, -bound1, bound1)
    w2 = jax.random.uniform(k3, (hidden_dim, output_dim), jnp.float32, -bound2, bound2)
    b2 = jax.random.uniform(k4, (output_dim,), jnp.float32, -bound2, bound2)
    return w1, b1, w2, b2


def _reference(x, params, return_softmax):
    w1, b1, w2, b2 = params
    h1 = jnp.dot(x.astype(w1.dtype), w1, preferred_element_type=jnp.float32) + b1
    h1 = jnp.maximum(h1, 0.0)
    h2 = jnp.dot(h1.astype(w2.dtype), w2, preferred_element_type=jnp.float32) + b2
    if return_softmax:
        return jax.nn.softmax(h2, axis=-1)
    return h2


if __name__ == "__main__":
    # config.input_dim=32, config.hidden_dim=32, config.output_dim=16
    input_dim, hidden_dim, output_dim = 32, 32, 16

    key = jax.random.PRNGKey(0)
    k_small, k_med, k_big, kp = jax.random.split(key, 4)
    params = prepare_params(*init_params(kp, input_dim, hidden_dim, output_dim))

    def check(x, **fwd_kwargs):
        logits = jax.block_until_ready(
            two_layers_forward(x, params, return_softmax=False, **fwd_kwargs))
        probs = jax.block_until_ready(
            two_layers_forward(x, params, return_softmax=True, **fwd_kwargs))
        assert jnp.allclose(logits, _reference(x, params, False), atol=1e-3, rtol=1e-3)
        assert jnp.allclose(probs, _reference(x, params, True), atol=5e-3, rtol=5e-3)
        assert jnp.allclose(jnp.sum(probs, axis=-1), 1.0, atol=5e-3)

    # --- Small batch (B=8): no-grid fast path. ---
    check(jax.random.normal(k_small, (8, input_dim), dtype=jnp.float32))

    # --- Realistic batch (B=1024): with the VMEM-derived threshold this also stays no-grid. ---
    check(jax.random.normal(k_med, (1024, input_dim), dtype=jnp.float32))

    # --- Grid path validation: force it (no_grid_rows=0) with tile>=2048 and >=4 tiles so the
    #     batch-tiled / "parallel" code path is compiled and checked too. ---
    check(jax.random.normal(k_big, (8192, input_dim), dtype=jnp.float32),
          batch_tile=2048, no_grid_rows=0)

    print("KERNEL_OK")
</pallas_src>

<mosaic_0001>
module attributes {stable_mosaic.version = 11 : i64} {
  func.func @_two_layer_kernel(%arg0: memref<8x32xf32, #tpu.memory_space<vmem>>, %arg1: memref<32x32xbf16, #tpu.memory_space<vmem>>, %arg2: memref<1x32xf32, #tpu.memory_space<vmem>>, %arg3: memref<32x16xbf16, #tpu.memory_space<vmem>>, %arg4: memref<1x16xf32, #tpu.memory_space<vmem>>, %arg5: memref<8x16xf32, #tpu.memory_space<vmem>>) attributes {dimension_semantics = [], scalar_prefetch = 0 : i64, scratch_operands = 0 : i64, tpu.core_type = #tpu.core_type<tc>} {
    %c0 = arith.constant 0 : index
    %c0_0 = arith.constant 0 : index
    %0 = vector.load %arg0[%c0, %c0_0] : memref<8x32xf32, #tpu.memory_space<vmem>>, vector<8x32xf32>
    %1 = arith.truncf %0 : vector<8x32xf32> to vector<8x32xbf16>
    %c0_1 = arith.constant 0 : index
    %c0_2 = arith.constant 0 : index
    %2 = vector.load %arg1[%c0_1, %c0_2] : memref<32x32xbf16, #tpu.memory_space<vmem>>, vector<32x32xbf16>
    %cst = arith.constant dense<0.000000e+00> : vector<8x32xf32>
    %3 = tpu.matmul %1, %2, %cst {dimension_numbers = #tpu.dot_dimension_numbers<[1], [0], [0], [1], [0, 0, 1, 1], [], []>} : vector<8x32xbf16>, vector<32x32xbf16>, vector<8x32xf32> -> vector<8x32xf32>
    %c0_3 = arith.constant 0 : index
    %c0_4 = arith.constant 0 : index
    %4 = vector.load %arg2[%c0_3, %c0_4] : memref<1x32xf32, #tpu.memory_space<vmem>>, vector<1x32xf32>
    %5 = vector.broadcast %4 : vector<1x32xf32> to vector<8x32xf32>
    %6 = arith.addf %3, %5 : vector<8x32xf32>
    %cst_5 = arith.constant 0.000000e+00 : f32
    %7 = vector.broadcast %cst_5 : f32 to vector<8x32xf32>
    %8 = arith.maximumf %6, %7 : vector<8x32xf32>
    %9 = arith.truncf %8 : vector<8x32xf32> to vector<8x32xbf16>
    %c0_6 = arith.constant 0 : index
    %c0_7 = arith.constant 0 : index
    %10 = vector.load %arg3[%c0_6, %c0_7] : memref<32x16xbf16, #tpu.memory_space<vmem>>, vector<32x16xbf16>
    %cst_8 = arith.constant dense<0.000000e+00> : vector<8x16xf32>
    %11 = tpu.matmul %9, %10, %cst_8 {dimension_numbers = #tpu.dot_dimension_numbers<[1], [0], [0], [1], [0, 0, 1, 1], [], []>} : vector<8x32xbf16>, vector<32x16xbf16>, vector<8x16xf32> -> vector<8x16xf32>
    %c0_9 = arith.constant 0 : index
    %c0_10 = arith.constant 0 : index
    %12 = vector.load %arg4[%c0_9, %c0_10] : memref<1x16xf32, #tpu.memory_space<vmem>>, vector<1x16xf32>
    %13 = vector.broadcast %12 : vector<1x16xf32> to vector<8x16xf32>
    %14 = arith.addf %11, %13 : vector<8x16xf32>
    %c0_11 = arith.constant 0 : index
    %c0_12 = arith.constant 0 : index
    %15 = vector.load %arg5[%c0_11, %c0_12] : memref<8x16xf32, #tpu.memory_space<vmem>>, vector<8x16xf32>
    tpu.vector_store %arg5[%c0_11, %c0_12], %14 {strides = array<i32>} : memref<8x16xf32, #tpu.memory_space<vmem>>, vector<8x16xf32>,
    return
  }
}

</mosaic_0001>

<llo_original>
// kernel: tpu_custom_call.1
$region0: #{tpu_custom_call.1}
  #allocation0 [shape = 'u32[]', space=smem, size = 0x4, offset = 0x4, fixed_abs, tag = 'smem constant byte address 0x4 - core index']
  #allocation1 [shape = 'u32[72,128]{1,0:T(1,128)}', space=vmem, size = 0x9000, scoped, tag = 'internal scratch']
  %s0 = inlined_call_operand.vmem [shape: f32[8,32], index: 0, kind: input, shape index: {}]
  %s1 = inlined_call_operand.vmem [shape: bf16[32,32], index: 1, kind: input, shape index: {}]
  %s2 = inlined_call_operand.vmem [shape: f32[1,32], index: 2, kind: input, shape index: {}]
  %s3 = inlined_call_operand.vmem [shape: bf16[32,16], index: 3, kind: input, shape index: {}]
  %s4 = inlined_call_operand.vmem [shape: f32[1,16], index: 4, kind: input, shape index: {}]
  %s5 = inlined_call_operand.hbm [shape: f32[8,16], index: 5, kind: output, shape index: {}]
  %s6 = sld [smem:[#allocation0]]
  $region30: #{tpu_custom_call.1} parent=0
    _
  %s8 = ssub.s32 1, %s6
  %s9 = scalar_select 0, %s8, %s6
  $region1: #{tpu_custom_call.1} parent=0
    #allocation2 [shape = 'u8[4096]{0}', space=vmem, size = 0x1000, scoped, tag = 'output window, operand 0, single buffered']
    #allocation3 [shape = 's32[1]{0}', space=sflag, size = 0x4, scoped, tag = 'scoped memory for tpu_custom_call.1']
    %10 = vsyncpa [#allocation3], 0
    // Predicated region
    $region2: #{tpu_custom_call.1} parent=1 // pred_check
      _
    $region3: #{tpu_custom_call.1} parent=1 // pred_check_branch
      %12 = sbr.rel (0) target = $region5
    $region4: #{tpu_custom_call.1} parent=1 // pred_region
      _
    $region5: #{tpu_custom_call.1} parent=1 // pred_fallthru
      _
    // Predicated region
    $region6: #{tpu_custom_call.1} parent=1 // pred_check
      _
    $region7: #{tpu_custom_call.1} parent=1 // pred_check_branch
      %14 = sbr.rel (0) target = $region9
    $region8: #{tpu_custom_call.1} parent=1 // pred_region
      _
    $region9: #{tpu_custom_call.1} parent=1 // pred_fallthru
      _
    // Predicated region
    $region10: #{tpu_custom_call.1} parent=1 // pred_check
      _
    $region11: #{tpu_custom_call.1} parent=1 // pred_check_branch
      %16 = sbr.rel (0) target = $region13
    $region12: #{tpu_custom_call.1} parent=1 // pred_region
      _
    $region13: #{tpu_custom_call.1} parent=1 // pred_fallthru
      _
    // Predicated region
    $region14: #{tpu_custom_call.1} parent=1 // pred_check
      _
    $region15: #{tpu_custom_call.1} parent=1 // pred_check_branch
      %18 = sbr.rel (0) target = $region17
    $region16: #{tpu_custom_call.1} parent=1 // pred_region
      _
    $region17: #{tpu_custom_call.1} parent=1 // pred_fallthru
      _
    // Predicated region
    $region18: #{tpu_custom_call.1} parent=1 // pred_check
      _
    $region19: #{tpu_custom_call.1} parent=1 // pred_check_branch
      %20 = sbr.rel (0) target = $region21
    $region20: #{tpu_custom_call.1} parent=1 // pred_region
      _
    $region21: #{tpu_custom_call.1} parent=1 // pred_fallthru
      _
    %v22 = vld [vmem:[%s0] sm:$0xff]
    %v23 = vpack.c.bf16 %v22, %v22
    %v24 = vld [vmem:[%s1] sm:$0xf]
    %v25 = vld [vmem:[%s1 + $0x4] sm:$0xf]
    %v26 = vld [vmem:[%s1 + $0x8] sm:$0xf]
    %v27 = vld [vmem:[%s1 + $0xc] sm:$0xf]
    %v28 = vld [vmem:[%s2] sm:$0x1]
    %v30 = vperm.slane %v28, 0
    %v36 = vunpack.c.l.b16 %v24
    %v37 = vunpack.c.l.b16 %v25
    %v38 = vunpack.c.l.b16 %v26
    %v39 = vunpack.c.l.b16 %v27
    %v40 = vpack.c.b16 %v37, %v36
    %v41 = vpack.c.b16 %v39, %v38
    %vm44 = vcmask 261120
    %v46 = vsel %vm44, %v23, 0
    %48 = vmatpush.bf16.msra.mxu0 0
    %49 = vmatpush.bf16.msra.mxu0 0
    %50 = vmatpush.bf16.msra.mxu0 0
    %51 = vmatpush.bf16.msra.mxu0 0
    %52 = vmatpush.bf16.msra.mxu0 0
    %53 = vmatpush.bf16.msra.mxu0 0
    %54 = vmatpush.bf16.msra.mxu0 %v41
    %55 = vmatpush.bf16.msra.mxu0 %v40
    %56 = vmatmul.bf16.gmra.mxu0 %v46
    %v57 = vpop.f32.mrf.mxu0
    %v58 = vadd.f32 %v30, %v57
    %v59 = vpop.f32.mrf.mxu0
    %60 = vdwg.mxu0
    %v61 = vmax.f32 %v58, 0.0
    %v62 = vpack.c.bf16 %v61, %v61
    %v63 = vld [vmem:[%s3] sm:$0xf]
    %v64 = vld [vmem:[%s3 + $0x4] sm:$0xf]
    %v65 = vld [vmem:[%s3 + $0x8] sm:$0xf]
    %v66 = vld [vmem:[%s3 + $0xc] sm:$0xf]
    %v67 = vld [vmem:[%s4] sm:$0x1]
    %v69 = vperm.slane %v67, 0
    %v75 = vunpack.c.l.b16 %v63
    %v76 = vunpack.c.l.b16 %v64
    %v77 = vunpack.c.l.b16 %v65
    %v78 = vunpack.c.l.b16 %v66
    %v79 = vpack.c.b16 %v76, %v75
    %v80 = vpack.c.b16 %v78, %v77
    %v84 = vsel %vm44, %v62, 0
    %86 = vmatpush.bf16.msra.mxu0 0
    %87 = vmatpush.bf16.msra.mxu0 0
    %88 = vmatpush.bf16.msra.mxu0 0
    %89 = vmatpush.bf16.msra.mxu0 0
    %90 = vmatpush.bf16.msra.mxu0 0
    %91 = vmatpush.bf16.msra.mxu0 0
    %92 = vmatpush.bf16.msra.mxu0 %v80
    %93 = vmatpush.bf16.msra.mxu0 %v79
    %94 = vmatmul.bf16.gmra.mxu0 %v84
    %v95 = vpop.f32.mrf.mxu0
    %v96 = vadd.f32 %v69, %v95
    %v97 = vpop.f32.mrf.mxu0
    %98 = vdwg.mxu0
    %vm99 = vcmask 130048
    %100 = vst.msk [vmem:[#allocation2] sm:$0xff] %vm99, %v96
    // Predicated region
    $region22: #{tpu_custom_call.1} parent=1 // pred_check
      _
    $region23: #{tpu_custom_call.1} parent=1 // pred_check_branch
      %102 = sbr.rel (0) target = $region25
    $region24: #{tpu_custom_call.1} parent=1 // pred_region
      %104 = vsyncadd [#allocation3], 0
      %s106 = sshll.u32 [#allocation2], 4
      %s107 = int_to_ptr.vmem [resolvable:$true] %s106
      %s108 = sshll.u32 %s5, 4
      %s109 = int_to_ptr.hbm [resolvable:$true] %s108
      %111 = dma.vmem_to_hbm [thread:$0]  %s107, 128, %s109, [#allocation3]
    $region25: #{tpu_custom_call.1} parent=1 // pred_fallthru
      _
    // Predicated region
    $region26: #{tpu_custom_call.1} parent=1 // pred_check
      _
    $region27: #{tpu_custom_call.1} parent=1 // pred_check_branch
      %113 = sbr.rel (0) target = $region29
    $region28: #{tpu_custom_call.1} parent=1 // pred_region
      %115 = dma.done [#allocation3], 128
    $region29: #{tpu_custom_call.1} parent=1 // pred_fallthru
      _
    %116 = vsyncpa [#allocation3], 1

</llo_original>
